<compile_context>
chip_gen: v6e
topology: v6e:2x2x1
jax: 0.10.0
libtpu: 0.0.40
codegen_flags: <defaults>
</compile_context>

<pallas_src>
import functools

import numpy as np
import jax
import jax.numpy as jnp
from jax import lax
from jax.experimental import pallas as pl
from jax.experimental.pallas import tpu as pltpu

EPS = 1e-5


# ---------------------------------------------------------------------------
# Small static helpers
# ---------------------------------------------------------------------------
def _round_up(x, m):
    return (x + m - 1) // m * m


def _is_pow2(x):
    return x > 0 and (x & (x - 1)) == 0


def _tap_offsets(k, pad):
    assert 2 * pad == k - 1, "ResBlock3d preserves spatial resolution"
    return [(kd - pad, kh - pad, kw - pad)
            for kd in range(k) for kh in range(k) for kw in range(k)]


@functools.lru_cache(maxsize=1)
def _pltpu_roll_matches_jnp_roll():
    """One-time probe: does pltpu.roll follow jnp.roll's sign convention?

    (Per review: 'sign-check against jnp.roll(v, -s, axis=-1)'.)
    """
    x = jnp.arange(8 * 128, dtype=jnp.float32).reshape(8, 128)

    def probe(x_ref, o_ref):
        o_ref[...] = pltpu.roll(x_ref[...], 1, 1)

    out = pl.pallas_call(
        probe, out_shape=jax.ShapeDtypeStruct((8, 128), jnp.float32))(x)
    return bool(jnp.array_equal(out, jnp.roll(x, 1, axis=1)))


# ---------------------------------------------------------------------------
# Fused ResBlock3d Pallas kernel
# ---------------------------------------------------------------------------
def _make_resblock_kernel(N, C, D, H, W, offsets, roll_matches_jnp):
    NC, DHW, HW = N * C, D * H * W, H * W
    ntaps = len(offsets)
    K = ntaps * NC
    K_pad = _round_up(K, 128)                 # MXU-friendly contraction dim

    # Flat lane shift per tap: conv source = dest + s within each (n, c) row.
    shifts = [dd * HW + dh * W + dw for (dd, dh, dw) in offsets]
    # Desired tap: out[:, m] = v[:, (m + s) % DHW]  ==  jnp.roll(v, -s, axis=-1)
    amounts = [((-s) % DHW) if roll_matches_jnp else (s % DHW) for s in shifts]

    def _axis_valid(idx, delta, size):
        if delta > 0:
            return idx < (size - delta)
        if delta < 0:
            return idx >= (-delta)
        return None

    def _bn_relu(v, g_rows, b_rows):
        # Training-mode BatchNorm: global per-channel batch stats (biased
        # variance), one-pass sum / sum-of-squares, folded into scale/shift.
        s1 = jnp.sum(v, axis=1, keepdims=True)            # (NC, 1)
        s2 = jnp.sum(v * v, axis=1, keepdims=True)        # (NC, 1)
        cs1, cs2 = s1[0:C], s2[0:C]                       # reduce batch copies
        for n in range(1, N):
            cs1 = cs1 + s1[n * C:(n + 1) * C]
            cs2 = cs2 + s2[n * C:(n + 1) * C]
        inv_cnt = 1.0 / float(N * DHW)
        mean_c = cs1 * inv_cnt
        var_c = jnp.maximum(cs2 * inv_cnt - mean_c * mean_c, 0.0)
        mean = jnp.concatenate([mean_c] * N, axis=0)      # back to (NC, 1)
        var = jnp.concatenate([var_c] * N, axis=0)
        scale = g_rows * lax.rsqrt(var + EPS)
        shift = b_rows - mean * scale
        return jnp.maximum(v * scale + shift, 0.0)

    def _conv(v, mask_ref, stack_ref, w_ref, bias_rows):
        # Stage the rolled+masked taps (rolls on the XLU, mask-mults on the
        # VPU) into an aligned (K_pad, DHW) slab, then do the whole
        # tap x channel mix as ONE MXU matmul with f32 accumulation.
        for t in range(ntaps):
            if offsets[t] == (0, 0, 0):
                tap = v                                    # centre: no roll/mask
            else:
                tap = (pltpu.roll(v, amounts[t], 1)
                       * mask_ref[t * NC:(t + 1) * NC, :])
            stack_ref[t * NC:(t + 1) * NC, :] = tap
        out = jnp.dot(w_ref[...], stack_ref[...],
                      preferred_element_type=jnp.float32,
                      precision=lax.Precision.HIGHEST)
        return out + bias_rows

    def kernel(x_ref, w1_ref, b1_ref, g1_ref, be1_ref,
               w2_ref, b2_ref, g2_ref, be2_ref,
               o_ref, mask_ref, stack_ref):
        # ---- one-time in-VMEM boundary-mask generation (no HBM mask DMA) ----
        flat = lax.broadcasted_iota(jnp.int32, (1, DHW), 1)
        if _is_pow2(W) and _is_pow2(H) and _is_pow2(D):
            lw, lh = W.bit_length() - 1, H.bit_length() - 1
            w_i = flat & (W - 1)
            h_i = (flat >> lw) & (H - 1)
            d_i = flat >> (lw + lh)
        else:
            # General (non-power-of-two) fallback path.
            w_i = flat % W
            h_i = (flat // W) % H
            d_i = flat // HW
        for t, (dd, dh, dw) in enumerate(offsets):
            if (dd, dh, dw) == (0, 0, 0):
                continue                                    # centre never masked
            conds = [c for c in (_axis_valid(d_i, dd, D),
                                 _axis_valid(h_i, dh, H),
                                 _axis_valid(w_i, dw, W)) if c is not None]
            valid = conds[0]
            for c in conds[1:]:
                valid = jnp.logical_and(valid, c)
            mrow = jnp.where(valid, 1.0, 0.0).astype(jnp.float32)   # (1, DHW)
            mask_ref[t * NC:(t + 1) * NC, :] = jnp.broadcast_to(mrow, (NC, DHW))
        # Zero the K padding rows once so the zero-padded weight columns never
        # multiply uninitialized VMEM.
        if K_pad > K:
            stack_ref[K:, :] = jnp.zeros((K_pad - K, DHW), jnp.float32)

        # ---- fused BN -> ReLU -> conv -> BN -> ReLU -> conv -> residual ----
        h = _bn_relu(x_ref[...], g1_ref[...], be1_ref[...])
        h = _conv(h, mask_ref, stack_ref, w1_ref, b1_ref[...])
        h = _bn_relu(h, g2_ref[...], be2_ref[...])
        h = _conv(h, mask_ref, stack_ref, w2_ref, b2_ref[...])
        o_ref[...] = h + x_ref[...]                         # residual from VMEM

    return kernel, K_pad


# ---------------------------------------------------------------------------
# Host-side conv-weight preprocessing: per-batch block matrix for the MXU mix
# ---------------------------------------------------------------------------
def _block_conv_weight(w_torch, N, K_pad):
    """(C_out, C_in, k, k, k) -> (N*C, K_pad) block matrix W_big such that
    conv_out_row[n*C+co] = W_big @ stacked_taps, stack row = t*(N*C)+n*C+ci."""
    C = w_torch.shape[0]
    ntaps = int(np.prod(w_torch.shape[2:]))
    w_flat = w_torch.reshape(C, C, ntaps)                  # [co, ci, t]
    eye_n = jnp.eye(N, dtype=w_flat.dtype)                 # [n, n']
    w_big = jnp.einsum("oit,nm->notmi", w_flat, eye_n)     # (n, co, t, n', ci)
    w_big = w_big.reshape(N * C, ntaps * N * C)
    if K_pad > ntaps * N * C:
        w_big = jnp.pad(w_big, ((0, 0), (0, K_pad - ntaps * N * C)))
    return w_big.astype(jnp.float32)


# ---------------------------------------------------------------------------
# Wrapper
# ---------------------------------------------------------------------------
def resblock3d_forward(x_ncdhw, params, k, pad):
    N, C, D, H, W = x_ncdhw.shape
    NC, DHW = N * C, D * H * W
    ntaps = k ** 3
    offsets = _tap_offsets(k, pad)

    # Lane-dense, fully sublane-packed layout: (N*C, D*H*W). This is a pure
    # contiguous-dim merge of NCDHW (free reshape, no transpose / extra HBM pass).
    x2d = x_ncdhw.reshape(NC, DHW).astype(jnp.float32)

    kernel, K_pad = _make_resblock_kernel(N, C, D, H, W, offsets,
                                          _pltpu_roll_matches_jnp_roll())

    w1 = _block_conv_weight(params["w1_torch"], N, K_pad)
    w2 = _block_conv_weight(params["w2_torch"], N, K_pad)

    def rows(p):            # per-channel param replicated to every (n, c) row
        return jnp.tile(p.astype(jnp.float32), (N,)).reshape(NC, 1)

    vmem = pl.BlockSpec(memory_space=pltpu.MemorySpace.VMEM)

    out2d = pl.pallas_call(
        kernel,
        out_shape=jax.ShapeDtypeStruct((NC, DHW), jnp.float32),
        in_specs=[vmem] * 9,
        out_specs=vmem,
        scratch_shapes=[
            pltpu.VMEM((ntaps * NC, DHW), jnp.float32),   # boundary masks (built in-kernel)
            pltpu.VMEM((K_pad, DHW), jnp.float32),        # staged tap stack for the MXU
        ],
    )(x2d, w1, rows(params["b1"]), rows(params["g1"]), rows(params["beta1"]),
      w2, rows(params["b2"]), rows(params["g2"]), rows(params["beta2"]))

    return out2d.reshape(N, C, D, H, W)


# ---------------------------------------------------------------------------
# Deterministic parameter init (PyTorch Conv3d default-style uniform bounds)
# ---------------------------------------------------------------------------
def init_params(key, C, k):
    fan_in = C * k ** 3
    bound = 1.0 / np.sqrt(fan_in)
    k0, k1, k2, k3 = jax.random.split(key, 4)
    w1_t = jax.random.uniform(k0, (C, C, k, k, k), jnp.float32, -bound, bound)
    w2_t = jax.random.uniform(k1, (C, C, k, k, k), jnp.float32, -bound, bound)
    b1 = jax.random.uniform(k2, (C,), jnp.float32, -bound, bound)
    b2 = jax.random.uniform(k3, (C,), jnp.float32, -bound, bound)
    return {
        "w1_torch": w1_t, "w2_torch": w2_t,
        "b1": b1, "b2": b2,
        # BatchNorm affine params: PyTorch default init gamma=1, beta=0
        "g1": jnp.ones((C,), jnp.float32), "beta1": jnp.zeros((C,), jnp.float32),
        "g2": jnp.ones((C,), jnp.float32), "beta2": jnp.zeros((C,), jnp.float32),
    }


# ---------------------------------------------------------------------------
# Pure-JAX reference (for correctness check)
# ---------------------------------------------------------------------------
def resblock3d_reference(x, params, k, pad):
    def bn(h, g, b):
        mean = h.mean(axis=(0, 2, 3, 4), keepdims=True)
        var = ((h - mean) ** 2).mean(axis=(0, 2, 3, 4), keepdims=True)
        return ((h - mean) / jnp.sqrt(var + EPS) * g.reshape(1, -1, 1, 1, 1)
                + b.reshape(1, -1, 1, 1, 1))

    def conv(h, w, b):
        y = lax.conv_general_dilated(
            h, w, (1, 1, 1), [(pad, pad)] * 3,
            dimension_numbers=("NCDHW", "OIDHW", "NCDHW"),
            precision=lax.Precision.HIGHEST)
        return y + b.reshape(1, -1, 1, 1, 1)

    h = jnp.maximum(bn(x, params["g1"], params["beta1"]), 0.0)
    h = conv(h, params["w1_torch"], params["b1"])
    h = jnp.maximum(bn(h, params["g2"], params["beta2"]), 0.0)
    h = conv(h, params["w2_torch"], params["b2"])
    return h + x


if __name__ == "__main__":
    # ResBlock3d(in_features=4, kernel_size=3, padding=1)
    C, K, PAD = 4, 3, 1
    N, D, H, W = 2, 8, 8, 8        # (N*C, D*H*W) = (8, 512): full sublanes, 4 lane tiles

    key = jax.random.PRNGKey(0)
    kx, kp = jax.random.split(key)
    x = jax.random.normal(kx, (N, C, D, H, W), jnp.float32)   # PyTorch NCDHW
    params = init_params(kp, C, K)

    out = jax.block_until_ready(resblock3d_forward(x, params, K, PAD))
    ref = jax.block_until_ready(resblock3d_reference(x, params, K, PAD))

    assert out.shape == x.shape and out.dtype == jnp.float32
    np.testing.assert_allclose(np.asarray(out), np.asarray(ref), rtol=1e-3, atol=1e-3)

    print("KERNEL_OK")
</pallas_src>

<mosaic_0001>
module attributes {stable_mosaic.version = 11 : i64} {
  func.func @probe(%arg0: memref<8x128xf32, #tpu.memory_space<vmem>>, %arg1: memref<8x128xf32, #tpu.memory_space<vmem>>) attributes {dimension_semantics = [], scalar_prefetch = 0 : i64, scratch_operands = 0 : i64, tpu.core_type = #tpu.core_type<tc>} {
    %c0 = arith.constant 0 : index
    %c0_0 = arith.constant 0 : index
    %0 = vector.load %arg0[%c0, %c0_0] : memref<8x128xf32, #tpu.memory_space<vmem>>, vector<8x128xf32>
    %c1_i32 = arith.constant 1 : i32
    %1 = tpu.dynamic_rotate %0 by %c1_i32 dim 1 : vector<8x128xf32>, i32 -> vector<8x128xf32>
    %c0_1 = arith.constant 0 : index
    %c0_2 = arith.constant 0 : index
    %2 = vector.load %arg1[%c0_1, %c0_2] : memref<8x128xf32, #tpu.memory_space<vmem>>, vector<8x128xf32>
    tpu.vector_store %arg1[%c0_1, %c0_2], %1 {strides = array<i32>} : memref<8x128xf32, #tpu.memory_space<vmem>>, vector<8x128xf32>,
    return
  }
}

</mosaic_0001>

<llo_original>
// kernel: tpu_custom_call.1
$region0: #{tpu_custom_call.1}
  #allocation0 [shape = 'u32[]', space=smem, size = 0x4, offset = 0x4, fixed_abs, tag = 'smem constant byte address 0x4 - core index']
  #allocation1 [shape = 'u32[144,128]{1,0:T(1,128)}', space=vmem, size = 0x12000, scoped, tag = 'internal scratch']
  %s0 = inlined_call_operand.hbm [shape: f32[8,128], index: 0, kind: input, shape index: {}]
  %s1 = inlined_call_operand.hbm [shape: f32[8,128], index: 1, kind: output, shape index: {}]
  %s2 = sld [smem:[#allocation0]]
  $region18: #{tpu_custom_call.1} parent=0
    _
  %s4 = ssub.s32 1, %s2
  %s5 = scalar_select 0, %s4, %s2
  $region1: #{tpu_custom_call.1} parent=0
    #allocation2 [shape = 'u8[4096]{0}', space=vmem, size = 0x1000, scoped, tag = 'input window, operand 0, single buffered']
    #allocation3 [shape = 's32[1]{0}', space=sflag, size = 0x4, scoped, tag = 'scoped memory for tpu_custom_call.1']
    #allocation4 [shape = 's32[1]{0}', space=sflag, size = 0x4, scoped, tag = 'scoped memory for tpu_custom_call.1']
    #allocation5 [shape = 'u8[4096]{0}', space=vmem, size = 0x1000, scoped, tag = 'output window, operand 0, single buffered']
    %6 = vsyncpa [#allocation3], 0
    %7 = vsyncpa [#allocation4], 0
    // Predicated region
    $region2: #{tpu_custom_call.1} parent=1 // pred_check
      _
    $region3: #{tpu_custom_call.1} parent=1 // pred_check_branch
      %9 = sbr.rel (0) target = $region5
    $region4: #{tpu_custom_call.1} parent=1 // pred_region
      %s11 = ssub.s32 128, 128
      %12 = vsyncadd [#allocation3], %s11
      %s14 = sshll.u32 [#allocation2], 4
      %s15 = int_to_ptr.vmem [resolvable:$true] %s14
      %17 = dma.hbm_to_vmem [thread:$0]  %s0, 128, %s15, [#allocation3]
    $region5: #{tpu_custom_call.1} parent=1 // pred_fallthru
      _
    // Predicated region
    $region6: #{tpu_custom_call.1} parent=1 // pred_check
      _
    $region7: #{tpu_custom_call.1} parent=1 // pred_check_branch
      %19 = sbr.rel (0) target = $region9
    $region8: #{tpu_custom_call.1} parent=1 // pred_region
      %20 = dma.done [#allocation3], 128
    $region9: #{tpu_custom_call.1} parent=1 // pred_fallthru
      _
    %v21 = vld [vmem:[#allocation2] sm:$0xff]
    %22 = vrot.lane.b32.xlu0 %v21, 1
    %v23 = vpop.permute.xlu0 %22
    %24 = vst [vmem:[#allocation5] sm:$0xff] %v23
    // Predicated region
    $region10: #{tpu_custom_call.1} parent=1 // pred_check
      _
    $region11: #{tpu_custom_call.1} parent=1 // pred_check_branch
      %26 = sbr.rel (0) target = $region13
    $region12: #{tpu_custom_call.1} parent=1 // pred_region
      %s28 = ssub.s32 128, 128
      %29 = vsyncadd [#allocation4], %s28
      %s31 = sshll.u32 [#allocation5], 4
      %s32 = int_to_ptr.vmem [resolvable:$true] %s31
      %34 = dma.vmem_to_hbm [thread:$0]  %s32, 128, %s1, [#allocation4]
    $region13: #{tpu_custom_call.1} parent=1 // pred_fallthru
      _
    // Predicated region
    $region14: #{tpu_custom_call.1} parent=1 // pred_check
      _
    $region15: #{tpu_custom_call.1} parent=1 // pred_check_branch
      %36 = sbr.rel (0) target = $region17
    $region16: #{tpu_custom_call.1} parent=1 // pred_region
      %37 = dma.done [#allocation4], 128
    $region17: #{tpu_custom_call.1} parent=1 // pred_fallthru
      _
    %38 = vsyncpa [#allocation3], 1
    %39 = vsyncpa [#allocation4], 1

</llo_original>
